<compile_context>
chip_gen: v6e
topology: v6e:2x2x1
jax: 0.10.0
libtpu: 0.0.40
codegen_flags: <defaults>
</compile_context>

<pallas_src>
import jax
import jax.numpy as jnp
import numpy as np
from jax.experimental import pallas as pl
from jax.experimental.pallas import tpu as pltpu

EPS = 1e-5  # BatchNorm2d default eps


def _pick_channel_block(c, elems_per_channel, budget_bytes=2 << 20):
    """Largest channel block that (a) divides c, (b) is c itself or a multiple
    of 8 (sublane tiling / aligned in-kernel slices), and (c) keeps a single
    block under `budget_bytes` of f32."""
    limit = max(1, budget_bytes // (4 * elems_per_channel))
    if c <= limit:
        return c
    best = 0
    d = 8
    while d <= limit:
        if c % d == 0:
            best = d
        d += 8
    return best if best else c


# --------------------------------------------------------------------------- #
# Kernel 1: per-channel-block depthwise convs + BN(batch stats) + ReLU + score #
# --------------------------------------------------------------------------- #
def _scores_kernel(x_ref, w1_ref, w2_ref, s_ref):
    cblk = s_ref.shape[2]
    c_total = w1_ref.shape[0]

    if cblk == c_total:
        # Single channel block: weights already fully resident, no slicing.
        w1 = w1_ref[...]                  # (CBLK, H)
        w2 = w2_ref[...]                  # (CBLK, W)
    else:
        c0 = pl.multiple_of(pl.program_id(0) * cblk, cblk)
        w1 = w1_ref[pl.ds(c0, cblk), :]   # (CBLK, H)
        w2 = w2_ref[pl.ds(c0, cblk), :]   # (CBLK, W)

    x = x_ref[...]                        # (B, CBLK, H, W)

    # conv1: depthwise kernel (H,1), valid padding -> collapses H.  (B, CBLK, W)
    xl1 = jnp.sum(x * w1[None, :, :, None], axis=2)
    # conv2: depthwise kernel (1,W), valid padding -> collapses W.  (B, CBLK, H)
    xl2 = jnp.sum(x * w2[None, :, None, :], axis=3)

    # BatchNorm2d (training mode: per-channel stats over batch+spatial, biased
    # variance, gamma=1, beta=0) followed by ReLU.
    def bn_relu(v):                       # v: (B, CBLK, N)
        n = v.shape[0] * v.shape[2]
        m = jnp.sum(jnp.sum(v, axis=2, keepdims=True), axis=0, keepdims=True) / n
        d = v - m
        var = jnp.sum(jnp.sum(d * d, axis=2, keepdims=True), axis=0,
                      keepdims=True) / n
        return jnp.maximum(d * jax.lax.rsqrt(var + EPS), 0.0)

    y1 = bn_relu(xl1)                     # (B, CBLK, W)
    y2 = bn_relu(xl2)                     # (B, CBLK, H)

    # torch.mm((1,W), (H,1)) per (batch, channel) == dot product (H == W).
    s_ref[0, :, :] = jnp.sum(y1 * y2, axis=-1)        # (B, CBLK)


# --------------------------------------------------------------------------- #
# Kernel 2: linear1 -> linear2 -> softmax(dim=1) on the tiny (B, C) matrix     #
# --------------------------------------------------------------------------- #
def _mlp_softmax_kernel(num_ref, w1t_ref, b1_ref, w2t_ref, b2_ref, sm_ref):
    num = num_ref[...]                                                  # (B, C)
    z = jnp.dot(num, w1t_ref[...], preferred_element_type=jnp.float32) + b1_ref[...]
    z = jnp.dot(z, w2t_ref[...], preferred_element_type=jnp.float32) + b2_ref[...]
    z = z - jnp.max(z, axis=1, keepdims=True)
    e = jnp.exp(z)
    sm_ref[...] = e / jnp.sum(e, axis=1, keepdims=True)                 # (B, C)


# --------------------------------------------------------------------------- #
# Kernel 3: channel-wise rescale, lane-dense (H*W flattened onto lanes)        #
# --------------------------------------------------------------------------- #
def _rescale_kernel(x_ref, sm_ref, o_ref):
    # x_ref: (1, CBLK, H*W), sm_ref: (1, CBLK, 1)
    o_ref[...] = x_ref[...] * sm_ref[...]


def inter_channel_forward(x, params):
    b, c, h, w = x.shape
    # TODO(synk): only the square (h == w, stride=(1,1)) branch of the PyTorch
    # forward is implemented; the h==2w / w==2h strided branches are analogous.
    assert h == w, "kernel implements the h == w path of Inter_channel"
    hw = h * w

    w1 = params["conv1_w"].astype(jnp.float32)    # (C, H) depthwise taps
    w2 = params["conv2_w"].astype(jnp.float32)    # (C, W) depthwise taps

    # ---- scores pass: grid over channel blocks --------------------------- #
    cblk1 = _pick_channel_block(c, b * h * w)
    nblk1 = c // cblk1

    scores = pl.pallas_call(
        _scores_kernel,
        out_shape=jax.ShapeDtypeStruct((nblk1, b, cblk1), jnp.float32),
        grid_spec=pltpu.PrefetchScalarGridSpec(
            num_scalar_prefetch=0,
            grid=(nblk1,),
            in_specs=[
                pl.BlockSpec((b, cblk1, h, w), lambda j: (0, j, 0, 0)),
                # weights: full untiled VMEM arrays, constant index -> one DMA
                pl.BlockSpec((c, h), lambda j: (0, 0)),
                pl.BlockSpec((c, w), lambda j: (0, 0)),
            ],
            out_specs=pl.BlockSpec((1, b, cblk1), lambda j: (j, 0, 0)),
        ),
        compiler_params=pltpu.CompilerParams(dimension_semantics=("parallel",)),
    )(x, w1, w2)

    # Replicate `torch.stack(num, 0).view(b, c)`: flatten scores in
    # (channel, batch) row-major order, then reinterpret as (B, C) — including
    # the batch/channel mixing of the reference code.
    num = scores.transpose(0, 2, 1).reshape(b, c)

    # ---- tiny MLP + softmax (computed exactly once) ----------------------- #
    w1t = params["lin1_w"].T.astype(jnp.float32)             # (C, 2C)
    b1 = params["lin1_b"].reshape(1, -1).astype(jnp.float32)
    w2t = params["lin2_w"].T.astype(jnp.float32)             # (2C, C)
    b2 = params["lin2_b"].reshape(1, -1).astype(jnp.float32)

    sm = pl.pallas_call(
        _mlp_softmax_kernel,
        out_shape=jax.ShapeDtypeStruct((b, c), jnp.float32),
    )(num, w1t, b1, w2t, b2)

    # ---- rescale pass: tiled, lane-dense, pipelined ------------------------ #
    x_flat = x.reshape(b, c, hw)          # free reshape; H*W lives on lanes
    sm3 = sm.reshape(b, c, 1)

    cblk2 = _pick_channel_block(c, hw)
    nblk2 = c // cblk2

    out_flat = pl.pallas_call(
        _rescale_kernel,
        out_shape=jax.ShapeDtypeStruct((b, c, hw), jnp.float32),
        grid_spec=pltpu.PrefetchScalarGridSpec(
            num_scalar_prefetch=0,
            grid=(b, nblk2),
            in_specs=[
                pl.BlockSpec((1, cblk2, hw), lambda i, j: (i, j, 0)),
                pl.BlockSpec((1, cblk2, 1), lambda i, j: (i, j, 0)),
            ],
            out_specs=pl.BlockSpec((1, cblk2, hw), lambda i, j: (i, j, 0)),
        ),
        compiler_params=pltpu.CompilerParams(
            dimension_semantics=("parallel", "parallel")),
    )(x_flat, sm3)

    return out_flat.reshape(b, c, h, w)


def reference_forward(x, params):
    """Pure-JAX mirror of the PyTorch forward (for correctness checking)."""
    b, c, h, w = x.shape
    xl1 = jnp.einsum("bchw,ch->bcw", x, params["conv1_w"])
    xl2 = jnp.einsum("bchw,cw->bch", x, params["conv2_w"])

    def bn_relu(v):  # (B, C, N) -> per-channel stats over (B, N)
        m = v.mean(axis=(0, 2), keepdims=True)
        var = ((v - m) ** 2).mean(axis=(0, 2), keepdims=True)
        return jnp.maximum((v - m) / jnp.sqrt(var + EPS), 0.0)

    y1 = bn_relu(xl1)
    y2 = bn_relu(xl2)
    s = jnp.sum(y1 * y2, axis=-1)          # (B, C)
    num = s.T.reshape(b, c)                # torch.stack(...).view(b, c)
    z = num @ params["lin1_w"].T + params["lin1_b"]
    z = z @ params["lin2_w"].T + params["lin2_b"]
    sm = jax.nn.softmax(z, axis=1)
    return x * sm[:, :, None, None]


if __name__ == "__main__":
    B, C, H, W = 2, 4, 16, 16
    key = jax.random.PRNGKey(0)
    kx, k1, k2, k3, k4, k5, k6 = jax.random.split(key, 7)
    x = jax.random.normal(kx, (B, C, H, W), dtype=jnp.float32)

    params = {
        # depthwise conv weights: kaiming_normal_(a=1) -> std = 1/sqrt(fan_in)
        "conv1_w": jax.random.normal(k1, (C, H), jnp.float32) / np.sqrt(H),
        "conv2_w": jax.random.normal(k2, (C, W), jnp.float32) / np.sqrt(W),
        # nn.Linear default init: U(-1/sqrt(fan_in), 1/sqrt(fan_in))
        "lin1_w": jax.random.uniform(k3, (2 * C, C), jnp.float32, -1.0, 1.0) / np.sqrt(C),
        "lin1_b": jax.random.uniform(k4, (2 * C,), jnp.float32, -1.0, 1.0) / np.sqrt(C),
        "lin2_w": jax.random.uniform(k5, (C, 2 * C), jnp.float32, -1.0, 1.0) / np.sqrt(2 * C),
        "lin2_b": jax.random.uniform(k6, (C,), jnp.float32, -1.0, 1.0) / np.sqrt(2 * C),
    }

    out = inter_channel_forward(x, params)
    out = jax.block_until_ready(out)

    ref = jax.block_until_ready(reference_forward(x, params))
    if not np.allclose(np.asarray(out), np.asarray(ref), rtol=1e-2, atol=1e-3):
        raise AssertionError("Pallas kernel output mismatch vs JAX reference")

    print("KERNEL_OK")
</pallas_src>

<mosaic_0001>
module attributes {stable_mosaic.version = 11 : i64} {
  func.func @_scores_kernel(%arg0: i32, %arg1: memref<2x4x16x16xf32, #tpu.memory_space<vmem>>, %arg2: memref<4x16xf32, #tpu.memory_space<vmem>>, %arg3: memref<4x16xf32, #tpu.memory_space<vmem>>, %arg4: memref<1x2x4xf32, #tpu.memory_space<vmem>>) attributes {dimension_semantics = [#tpu.dimension_semantics<parallel>], iteration_bounds = array<i64: 1>, scalar_prefetch = 0 : i64, scratch_operands = 0 : i64, tpu.core_type = #tpu.core_type<tc>, window_params = [{transform_indices = @transform_0, window_bounds = array<i64: 2, 4, 16, 16>}, {pipeline_mode = #tpu.pipeline_mode<synchronous>, transform_indices = @transform_1, window_bounds = array<i64: 4, 16>}, {pipeline_mode = #tpu.pipeline_mode<synchronous>, transform_indices = @transform_2, window_bounds = array<i64: 4, 16>}, {transform_indices = @transform_3, window_bounds = array<i64: 1, 2, 4>}]} {
    %c0 = arith.constant 0 : index
    %c0_0 = arith.constant 0 : index
    %0 = vector.load %arg2[%c0, %c0_0] : memref<4x16xf32, #tpu.memory_space<vmem>>, vector<4x16xf32>
    %c0_1 = arith.constant 0 : index
    %c0_2 = arith.constant 0 : index
    %1 = vector.load %arg3[%c0_1, %c0_2] : memref<4x16xf32, #tpu.memory_space<vmem>>, vector<4x16xf32>
    %c0_3 = arith.constant 0 : index
    %c0_4 = arith.constant 0 : index
    %c0_5 = arith.constant 0 : index
    %c0_6 = arith.constant 0 : index
    %2 = vector.load %arg1[%c0_3, %c0_4, %c0_5, %c0_6] : memref<2x4x16x16xf32, #tpu.memory_space<vmem>>, vector<2x4x16x16xf32>
    %3 = vector.shape_cast %0 : vector<4x16xf32> to vector<1x4x16x1xf32>
    %4 = vector.broadcast %3 : vector<1x4x16x1xf32> to vector<2x4x16x16xf32>
    %5 = arith.mulf %2, %4 : vector<2x4x16x16xf32>
    %cst = arith.constant dense<0.000000e+00> : vector<2x4x16xf32>
    %6 = vector.multi_reduction <add>, %5, %cst [2] : vector<2x4x16x16xf32> to vector<2x4x16xf32>
    %7 = vector.shape_cast %1 : vector<4x16xf32> to vector<1x4x1x16xf32>
    %8 = vector.broadcast %7 : vector<1x4x1x16xf32> to vector<2x4x16x16xf32>
    %9 = arith.mulf %2, %8 : vector<2x4x16x16xf32>
    %cst_7 = arith.constant dense<0.000000e+00> : vector<2x4x16xf32>
    %10 = vector.multi_reduction <add>, %9, %cst_7 [3] : vector<2x4x16x16xf32> to vector<2x4x16xf32>
    %cst_8 = arith.constant dense<0.000000e+00> : vector<2x4xf32>
    %11 = vector.multi_reduction <add>, %6, %cst_8 [2] : vector<2x4x16xf32> to vector<2x4xf32>
    %12 = vector.shape_cast %11 : vector<2x4xf32> to vector<2x4x1xf32>
    %cst_9 = arith.constant dense<0.000000e+00> : vector<4x1xf32>
    %13 = vector.multi_reduction <add>, %12, %cst_9 [0] : vector<2x4x1xf32> to vector<4x1xf32>
    %14 = vector.shape_cast %13 : vector<4x1xf32> to vector<1x4x1xf32>
    %cst_10 = arith.constant 3.200000e+01 : f32
    %15 = vector.broadcast %cst_10 : f32 to vector<1x4x1xf32>
    %16 = arith.divf %14, %15 : vector<1x4x1xf32>
    %17 = vector.broadcast %16 : vector<1x4x1xf32> to vector<2x4x16xf32>
    %18 = arith.subf %6, %17 : vector<2x4x16xf32>
    %19 = arith.mulf %18, %18 : vector<2x4x16xf32>
    %cst_11 = arith.constant dense<0.000000e+00> : vector<2x4xf32>
    %20 = vector.multi_reduction <add>, %19, %cst_11 [2] : vector<2x4x16xf32> to vector<2x4xf32>
    %21 = vector.shape_cast %20 : vector<2x4xf32> to vector<2x4x1xf32>
    %cst_12 = arith.constant dense<0.000000e+00> : vector<4x1xf32>
    %22 = vector.multi_reduction <add>, %21, %cst_12 [0] : vector<2x4x1xf32> to vector<4x1xf32>
    %23 = vector.shape_cast %22 : vector<4x1xf32> to vector<1x4x1xf32>
    %cst_13 = arith.constant 3.200000e+01 : f32
    %24 = vector.broadcast %cst_13 : f32 to vector<1x4x1xf32>
    %25 = arith.divf %23, %24 : vector<1x4x1xf32>
    %cst_14 = arith.constant 9.99999974E-6 : f32
    %26 = vector.broadcast %cst_14 : f32 to vector<1x4x1xf32>
    %27 = arith.addf %25, %26 : vector<1x4x1xf32>
    %28 = math.rsqrt %27 : vector<1x4x1xf32>
    %29 = vector.broadcast %28 : vector<1x4x1xf32> to vector<2x4x16xf32>
    %30 = arith.mulf %18, %29 : vector<2x4x16xf32>
    %cst_15 = arith.constant 0.000000e+00 : f32
    %31 = vector.broadcast %cst_15 : f32 to vector<2x4x16xf32>
    %32 = arith.maximumf %30, %31 : vector<2x4x16xf32>
    %cst_16 = arith.constant dense<0.000000e+00> : vector<2x4xf32>
    %33 = vector.multi_reduction <add>, %10, %cst_16 [2] : vector<2x4x16xf32> to vector<2x4xf32>
    %34 = vector.shape_cast %33 : vector<2x4xf32> to vector<2x4x1xf32>
    %cst_17 = arith.constant dense<0.000000e+00> : vector<4x1xf32>
    %35 = vector.multi_reduction <add>, %34, %cst_17 [0] : vector<2x4x1xf32> to vector<4x1xf32>
    %36 = vector.shape_cast %35 : vector<4x1xf32> to vector<1x4x1xf32>
    %cst_18 = arith.constant 3.200000e+01 : f32
    %37 = vector.broadcast %cst_18 : f32 to vector<1x4x1xf32>
    %38 = arith.divf %36, %37 : vector<1x4x1xf32>
    %39 = vector.broadcast %38 : vector<1x4x1xf32> to vector<2x4x16xf32>
    %40 = arith.subf %10, %39 : vector<2x4x16xf32>
    %41 = arith.mulf %40, %40 : vector<2x4x16xf32>
    %cst_19 = arith.constant dense<0.000000e+00> : vector<2x4xf32>
    %42 = vector.multi_reduction <add>, %41, %cst_19 [2] : vector<2x4x16xf32> to vector<2x4xf32>
    %43 = vector.shape_cast %42 : vector<2x4xf32> to vector<2x4x1xf32>
    %cst_20 = arith.constant dense<0.000000e+00> : vector<4x1xf32>
    %44 = vector.multi_reduction <add>, %43, %cst_20 [0] : vector<2x4x1xf32> to vector<4x1xf32>
    %45 = vector.shape_cast %44 : vector<4x1xf32> to vector<1x4x1xf32>
    %cst_21 = arith.constant 3.200000e+01 : f32
    %46 = vector.broadcast %cst_21 : f32 to vector<1x4x1xf32>
    %47 = arith.divf %45, %46 : vector<1x4x1xf32>
    %cst_22 = arith.constant 9.99999974E-6 : f32
    %48 = vector.broadcast %cst_22 : f32 to vector<1x4x1xf32>
    %49 = arith.addf %47, %48 : vector<1x4x1xf32>
    %50 = math.rsqrt %49 : vector<1x4x1xf32>
    %51 = vector.broadcast %50 : vector<1x4x1xf32> to vector<2x4x16xf32>
    %52 = arith.mulf %40, %51 : vector<2x4x16xf32>
    %cst_23 = arith.constant 0.000000e+00 : f32
    %53 = vector.broadcast %cst_23 : f32 to vector<2x4x16xf32>
    %54 = arith.maximumf %52, %53 : vector<2x4x16xf32>
    %55 = arith.mulf %32, %54 : vector<2x4x16xf32>
    %cst_24 = arith.constant dense<0.000000e+00> : vector<2x4xf32>
    %56 = vector.multi_reduction <add>, %55, %cst_24 [2] : vector<2x4x16xf32> to vector<2x4xf32>
    %c0_25 = arith.constant 0 : index
    %c0_26 = arith.constant 0 : index
    %c0_27 = arith.constant 0 : index
    %57 = vector.load %arg4[%c0_25, %c0_26, %c0_27] : memref<1x2x4xf32, #tpu.memory_space<vmem>>, vector<1x2x4xf32>
    %58 = vector.shape_cast %57 : vector<1x2x4xf32> to vector<2x4xf32>
    %59 = vector.shape_cast %56 : vector<2x4xf32> to vector<1x2x4xf32>
    tpu.vector_store %arg4[%c0_25, %c0_26, %c0_27], %59 {strides = array<i32>} : memref<1x2x4xf32, #tpu.memory_space<vmem>>, vector<1x2x4xf32>,
    return
  }
  func.func @transform_0(%arg0: i32) -> (i32, i32, i32, i32) {
    %c0_i32 = arith.constant 0 : i32
    %c0_i32_0 = arith.constant 0 : i32
    %c0_i32_1 = arith.constant 0 : i32
    %c0_i32_2 = arith.constant 0 : i32
    return %c0_i32, %arg0, %c0_i32_0, %c0_i32_1 : i32, i32, i32, i32
  }
  func.func @transform_1(%arg0: i32) -> (i32, i32) {
    %c0_i32 = arith.constant 0 : i32
    %c0_i32_0 = arith.constant 0 : i32
    %c0_i32_1 = arith.constant 0 : i32
    return %c0_i32, %c0_i32_0 : i32, i32
  }
  func.func @transform_2(%arg0: i32) -> (i32, i32) {
    %c0_i32 = arith.constant 0 : i32
    %c0_i32_0 = arith.constant 0 : i32
    %c0_i32_1 = arith.constant 0 : i32
    return %c0_i32, %c0_i32_0 : i32, i32
  }
  func.func @transform_3(%arg0: i32) -> (i32, i32, i32) {
    %c0_i32 = arith.constant 0 : i32
    %c0_i32_0 = arith.constant 0 : i32
    %c0_i32_1 = arith.constant 0 : i32
    return %arg0, %c0_i32, %c0_i32_0 : i32, i32, i32
  }
}

</mosaic_0001>

<llo_original>
// kernel: tpu_custom_call.1
$region0: #{tpu_custom_call.1}
  #allocation0 [shape = 'u32[]', space=smem, size = 0x4, offset = 0x4, fixed_abs, tag = 'smem constant byte address 0x4 - core index']
  #allocation1 [shape = 'u32[144,128]{1,0:T(1,128)}', space=vmem, size = 0x12000, scoped, tag = 'internal scratch']
  %s0 = inlined_call_operand.hbm [shape: f32[2,4,16,16], index: 0, kind: input, shape index: {}]
  %s1 = inlined_call_operand.hbm [shape: f32[4,16], index: 1, kind: input, shape index: {}]
  %s2 = inlined_call_operand.hbm [shape: f32[4,16], index: 2, kind: input, shape index: {}]
  %s3 = inlined_call_operand.hbm [shape: f32[1,2,4], index: 3, kind: output, shape index: {}]
  %s4 = sld [smem:[#allocation0]]
  $region34: #{tpu_custom_call.1} parent=0
    _
  %s6 = ssub.s32 1, %s4
  %s7 = scalar_select 0, %s6, %s4
  $region1: #{tpu_custom_call.1} parent=0
    #allocation2 [shape = 'u8[65536]{0}', space=vmem, size = 0x10000, scoped, tag = 'input window, operand 0, single buffered']
    #allocation3 [shape = 's32[1]{0}', space=sflag, size = 0x4, scoped, tag = 'scoped memory for tpu_custom_call.1']
    #allocation4 [shape = 's32[1]{0}', space=sflag, size = 0x4, scoped, tag = 'scoped memory for tpu_custom_call.1']
    #allocation5 [shape = 'u8[2048]{0}', space=vmem, size = 0x800, scoped, tag = 'input window, operand 1, single buffered']
    #allocation6 [shape = 's32[1]{0}', space=sflag, size = 0x4, scoped, tag = 'scoped memory for tpu_custom_call.1']
    #allocation7 [shape = 'u8[2048]{0}', space=vmem, size = 0x800, scoped, tag = 'input window, operand 2, single buffered']
    #allocation8 [shape = 'u8[1024]{0}', space=vmem, size = 0x400, scoped, tag = 'output window, operand 0, single buffered']
    %8 = vsyncpa [#allocation3], 0
    %9 = vsyncpa [#allocation6], 0
    %10 = vsyncpa [#allocation4], 0
    // Predicated region
    $region2: #{tpu_custom_call.1} parent=1 // pred_check
      _
    $region3: #{tpu_custom_call.1} parent=1 // pred_check_branch
      %12 = sbr.rel (0) target = $region5
    $region4: #{tpu_custom_call.1} parent=1 // pred_region
      %s14 = ssub.s32 2048, 2048
      %15 = vsyncadd [#allocation3], %s14
      %s16 = sshll.u32 [#allocation2], 4
      %s17 = int_to_ptr.vmem [resolvable:$true] %s16
      %22 = dma.hbm_to_vmem [thread:$0]  %s0, 2048, %s17, [#allocation3], 128, 128, 8
    $region5: #{tpu_custom_call.1} parent=1 // pred_fallthru
      _
    // Predicated region
    $region6: #{tpu_custom_call.1} parent=1 // pred_check
      _
    $region7: #{tpu_custom_call.1} parent=1 // pred_check_branch
      %24 = sbr.rel (0) target = $region9
    $region8: #{tpu_custom_call.1} parent=1 // pred_region
      %s26 = ssub.s32 64, 64
      %27 = vsyncadd [#allocation6], %s26
      %s29 = sshll.u32 [#allocation5], 4
      %s30 = int_to_ptr.vmem [resolvable:$true] %s29
      %32 = dma.hbm_to_vmem [thread:$0]  %s1, 64, %s30, [#allocation6]
    $region9: #{tpu_custom_call.1} parent=1 // pred_fallthru
      _
    // Predicated region
    $region10: #{tpu_custom_call.1} parent=1 // pred_check
      _
    $region11: #{tpu_custom_call.1} parent=1 // pred_check_branch
      %34 = sbr.rel (0) target = $region13
    $region12: #{tpu_custom_call.1} parent=1 // pred_region
      %s36 = ssub.s32 64, 64
      %37 = vsyncadd [#allocation6], %s36
      %s39 = sshll.u32 [#allocation7], 4
      %s40 = int_to_ptr.vmem [resolvable:$true] %s39
      %42 = dma.hbm_to_vmem [thread:$0]  %s2, 64, %s40, [#allocation6]
    $region13: #{tpu_custom_call.1} parent=1 // pred_fallthru
      _
    // Predicated region
    $region14: #{tpu_custom_call.1} parent=1 // pred_check
      _
    $region15: #{tpu_custom_call.1} parent=1 // pred_check_branch
      %44 = sbr.rel (0) target = $region17
    $region16: #{tpu_custom_call.1} parent=1 // pred_region
      %45 = dma.done [#allocation3], 2048
    $region17: #{tpu_custom_call.1} parent=1 // pred_fallthru
      _
    // Predicated region
    $region18: #{tpu_custom_call.1} parent=1 // pred_check
      _
    $region19: #{tpu_custom_call.1} parent=1 // pred_check_branch
      %47 = sbr.rel (0) target = $region21
    $region20: #{tpu_custom_call.1} parent=1 // pred_region
      %48 = dma.done [#allocation6], 64
    $region21: #{tpu_custom_call.1} parent=1 // pred_fallthru
      _
    // Predicated region
    $region22: #{tpu_custom_call.1} parent=1 // pred_check
      _
    $region23: #{tpu_custom_call.1} parent=1 // pred_check_branch
      %50 = sbr.rel (0) target = $region25
    $region24: #{tpu_custom_call.1} parent=1 // pred_region
      %51 = dma.done [#allocation6], 64
    $region25: #{tpu_custom_call.1} parent=1 // pred_fallthru
      _
    %v52 = vld [vmem:[#allocation5] sm:$0xf]
    %v53 = vld [vmem:[#allocation7] sm:$0xf]
    %v54 = vld [vmem:[#allocation2] sm:$0xff]
    %v55 = vld [vmem:[#allocation2 + $0x8] sm:$0xff]
    %v56 = vld [vmem:[#allocation2 + $0x10] sm:$0xff]
    %v57 = vld [vmem:[#allocation2 + $0x18] sm:$0xff]
    %v58 = vld [vmem:[#allocation2 + $0x20] sm:$0xff]
    %v59 = vld [vmem:[#allocation2 + $0x28] sm:$0xff]
    %v60 = vld [vmem:[#allocation2 + $0x30] sm:$0xff]
    %v61 = vld [vmem:[#allocation2 + $0x38] sm:$0xff]
    %v62 = vld [vmem:[#allocation2 + $0x40] sm:$0xff]
    %v63 = vld [vmem:[#allocation2 + $0x48] sm:$0xff]
    %v64 = vld [vmem:[#allocation2 + $0x50] sm:$0xff]
    %v65 = vld [vmem:[#allocation2 + $0x58] sm:$0xff]
    %v66 = vld [vmem:[#allocation2 + $0x60] sm:$0xff]
    %v67 = vld [vmem:[#allocation2 + $0x68] sm:$0xff]
    %v68 = vld [vmem:[#allocation2 + $0x70] sm:$0xff]
    %v69 = vld [vmem:[#allocation2 + $0x78] sm:$0xff]
    %v70 = vlaneseq
    %v71 = vshrl.u32 %v70, 7
    %v72 = vsub.s32 0, %v71
    %v73 = vrot.slane %v52, %v72
    %75 = vbcast.lane.b32.xlu0 %v73, 256
    %v76 = vpop.permute.xlu0 %75
    %s78 = sor.u32 256, 8
    %79 = vbcast.lane.b32.xlu0 %v73, %s78
    %v80 = vpop.permute.xlu0 %79
    %v81 = vlaneseq
    %v82 = vshrl.u32 %v81, 7
    %v83 = vsub.s32 1, %v82
    %v84 = vrot.slane %v52, %v83
    %86 = vbcast.lane.b32.xlu0 %v84, 256
    %v87 = vpop.permute.xlu0 %86
    %s89 = sor.u32 256, 8
    %90 = vbcast.lane.b32.xlu0 %v84, %s89
    %v91 = vpop.permute.xlu0 %90
    %v92 = vlaneseq
    %v93 = vshrl.u32 %v92, 7
    %v94 = vsub.s32 2, %v93
    %v95 = vrot.slane %v52, %v94
    %97 = vbcast.lane.b32.xlu0 %v95, 256
    %v98 = vpop.permute.xlu0 %97
    %s100 = sor.u32 256, 8
    %101 = vbcast.lane.b32.xlu0 %v95, %s100
    %v102 = vpop.permute.xlu0 %101
    %v103 = vlaneseq
    %v104 = vshrl.u32 %v103, 7
    %v105 = vsub.s32 3, %v104
    %v106 = vrot.slane %v52, %v105
    %108 = vbcast.lane.b32.xlu0 %v106, 256
    %v109 = vpop.permute.xlu0 %108
    %s111 = sor.u32 256, 8
    %112 = vbcast.lane.b32.xlu0 %v106, %s111
    %v113 = vpop.permute.xlu0 %112
    %v114 = vmul.f32 %v54, %v76
    %v115 = vmul.f32 %v55, %v80
    %v116 = vmul.f32 %v56, %v87
    %v117 = vmul.f32 %v57, %v91
    %v118 = vmul.f32 %v58, %v98
    %v119 = vmul.f32 %v59, %v102
    %v120 = vmul.f32 %v60, %v109
    %v121 = vmul.f32 %v61, %v113
    %v122 = vmul.f32 %v62, %v76
    %v123 = vmul.f32 %v63, %v80
    %v124 = vmul.f32 %v64, %v87
    %v125 = vmul.f32 %v65, %v91
    %v126 = vmul.f32 %v66, %v98
    %v127 = vmul.f32 %v67, %v102
    %v128 = vmul.f32 %v68, %v109
    %v129 = vmul.f32 %v69, %v113
    %vm130 = vcmask 130048
    %v131 = vsel %vm130, %v114, 0.0
    %v132 = vsel %vm130, %v115, 0.0
    %v133 = vadd.f32 %v131, %v132
    %v134 = vrot.slane %v133, 4
    %v135 = vadd.f32 %v133, %v134
    %v136 = vrot.slane %v135, 2
    %v137 = vadd.f32 %v135, %v136
    %v138 = vrot.slane %v137, 1
    %v139 = vadd.f32 %v137, %v138
    %v140 = vsel %vm130, %v116, 0.0
    %v141 = vsel %vm130, %v117, 0.0
    %v142 = vadd.f32 %v140, %v141
    %v143 = vrot.slane %v142, 4
    %v144 = vadd.f32 %v142, %v143
    %v145 = vrot.slane %v144, 2
    %v146 = vadd.f32 %v144, %v145
    %v147 = vrot.slane %v146, 1
    %v148 = vadd.f32 %v146, %v147
    %v149 = vsel %vm130, %v118, 0.0
    %v150 = vsel %vm130, %v119, 0.0
    %v151 = vadd.f32 %v149, %v150
    %v152 = vrot.slane %v151, 4
    %v153 = vadd.f32 %v151, %v152
    %v154 = vrot.slane %v153, 2
    %v155 = vadd.f32 %v153, %v154
    %v156 = vrot.slane %v155, 1
    %v157 = vadd.f32 %v155, %v156
    %v158 = vsel %vm130, %v120, 0.0
    %v159 = vsel %vm130, %v121, 0.0
    %v160 = vadd.f32 %v158, %v159
    %v161 = vrot.slane %v160, 4
    %v162 = vadd.f32 %v160, %v161
    %v163 = vrot.slane %v162, 2
    %v164 = vadd.f32 %v162, %v163
    %v165 = vrot.slane %v164, 1
    %v166 = vadd.f32 %v164, %v165
    %v167 = vsel %vm130, %v122, 0.0
    %v168 = vsel %vm130, %v123, 0.0
    %v169 = vadd.f32 %v167, %v168
    %v170 = vrot.slane %v169, 4
    %v171 = vadd.f32 %v169, %v170
    %v172 = vrot.slane %v171, 2
    %v173 = vadd.f32 %v171, %v172
    %v174 = vrot.slane %v173, 1
    %v175 = vadd.f32 %v173, %v174
    %v176 = vsel %vm130, %v124, 0.0
    %v177 = vsel %vm130, %v125, 0.0
    %v178 = vadd.f32 %v176, %v177
    %v179 = vrot.slane %v178, 4
    %v180 = vadd.f32 %v178, %v179
    %v181 = vrot.slane %v180, 2
    %v182 = vadd.f32 %v180, %v181
    %v183 = vrot.slane %v182, 1
    %v184 = vadd.f32 %v182, %v183
    %v185 = vsel %vm130, %v126, 0.0
    %v186 = vsel %vm130, %v127, 0.0
    %v187 = vadd.f32 %v185, %v186
    %v188 = vrot.slane %v187, 4
    %v189 = vadd.f32 %v187, %v188
    %v190 = vrot.slane %v189, 2
    %v191 = vadd.f32 %v189, %v190
    %v192 = vrot.slane %v191, 1
    %v193 = vadd.f32 %v191, %v192
    %v194 = vsel %vm130, %v128, 0.0
    %v195 = vsel %vm130, %v129, 0.0
    %v196 = vadd.f32 %v194, %v195
    %v197 = vrot.slane %v196, 4
    %v198 = vadd.f32 %v196, %v197
    %v199 = vrot.slane %v198, 2
    %v200 = vadd.f32 %v198, %v199
    %v201 = vrot.slane %v200, 1
    %v202 = vadd.f32 %v200, %v201
    %v205 = vunpack.c.l.s4 1966171168
    %v206 = vunpack.c.0.s8 %v205
    %v207 = vlaneseq
    %v208 = vshrl.u32 %v207, 7
    %v209 = vsub.s32 %v206, %v208
    %v210 = vrot.slane %v53, %v209
    %v211 = vcombine.high %v210, %v210
    %v213 = vunpack.c.l.s4 1966171168
    %v214 = vunpack.c.0.s8 %v213
    %v215 = vlaneseq
    %v216 = vshrl.u32 %v215, 7
    %v217 = vsub.s32 %v214, %v216
    %v218 = vrot.slane %v210, %v217
    %v220 = vunpack.c.l.s4 1966171168
    %v221 = vunpack.c.0.s8 %v220
    %v222 = vlaneseq
    %v223 = vshrl.u32 %v222, 7
    %v224 = vsub.s32 %v221, %v223
    %v225 = vrot.slane %v211, %v224
    %v226 = vcombine.high %v218, %v218
    %v227 = vcombine.high %v225, %v225
    %v228 = vlaneseq
    %v229 = vshrl.u32 %v228, 7
    %v230 = vsub.s32 0, %v229
    %v231 = vrot.slane %v218, %v230
    %v232 = vlaneseq
    %v233 = vshrl.u32 %v232, 7
    %v234 = vsub.s32 0, %v233
    %v235 = vrot.slane %v225, %v234
    %v236 = vlaneseq
    %v237 = vshrl.u32 %v236, 7
    %v238 = vsub.s32 0, %v237
    %v239 = vrot.slane %v226, %v238
    %v240 = vlaneseq
    %v241 = vshrl.u32 %v240, 7
    %v242 = vsub.s32 0, %v241
    %v243 = vrot.slane %v227, %v242
    %v248 = vmul.f32 %v54, %v231
    %v249 = vmul.f32 %v55, %v231
    %v250 = vmul.f32 %v56, %v235
    %v251 = vmul.f32 %v57, %v235
    %v252 = vmul.f32 %v58, %v239
    %v253 = vmul.f32 %v59, %v239
    %v254 = vmul.f32 %v60, %v243
    %v255 = vmul.f32 %v61, %v243
    %v256 = vmul.f32 %v62, %v231
    %v257 = vmul.f32 %v63, %v231
    %v258 = vmul.f32 %v64, %v235
    %v259 = vmul.f32 %v65, %v235
    %v260 = vmul.f32 %v66, %v239
    %v261 = vmul.f32 %v67, %v239
    %v262 = vmul.f32 %v68, %v243
    %v263 = vmul.f32 %v69, %v243
    %v264 = vsel %vm130, %v248, 0.0
    %265 = vadd.xlane.f32.xlu0 %v264
    %v266 = vpop.xlane.xlu0 %265
    %v267 = vsel %vm130, %v249, 0.0
    %268 = vadd.xlane.f32.xlu0 %v267
    %v269 = vpop.xlane.xlu0 %268
    %v270 = vsel %vm130, %v250, 0.0
    %271 = vadd.xlane.f32.xlu0 %v270
    %v272 = vpop.xlane.xlu0 %271
    %v273 = vsel %vm130, %v251, 0.0
    %274 = vadd.xlane.f32.xlu0 %v273
    %v275 = vpop.xlane.xlu0 %274
    %v276 = vsel %vm130, %v252, 0.0
    %277 = vadd.xlane.f32.xlu0 %v276
    %v278 = vpop.xlane.xlu0 %277
    %v279 = vsel %vm130, %v253, 0.0
    %280 = vadd.xlane.f32.xlu0 %v279
    %v281 = vpop.xlane.xlu0 %280
    %v282 = vsel %vm130, %v254, 0.0
    %283 = vadd.xlane.f32.xlu0 %v282
    %v284 = vpop.xlane.xlu0 %283
    %v285 = vsel %vm130, %v255, 0.0
    %286 = vadd.xlane.f32.xlu0 %v285
    %v287 = vpop.xlane.xlu0 %286
    %v288 = vsel %vm130, %v256, 0.0
    %289 = vadd.xlane.f32.xlu0 %v288
    %v290 = vpop.xlane.xlu0 %289
    %v291 = vsel %vm130, %v257, 0.0
    %292 = vadd.xlane.f32.xlu0 %v291
    %v293 = vpop.xlane.xlu0 %292
    %v294 = vsel %vm130, %v258, 0.0
    %295 = vadd.xlane.f32.xlu0 %v294
    %v296 = vpop.xlane.xlu0 %295
    %v297 = vsel %vm130, %v259, 0.0
    %298 = vadd.xlane.f32.xlu0 %v297
    %v299 = vpop.xlane.xlu0 %298
    %v300 = vsel %vm130, %v260, 0.0
    %301 = vadd.xlane.f32.xlu0 %v300
    %v302 = vpop.xlane.xlu0 %301
    %v303 = vsel %vm130, %v261, 0.0
    %304 = vadd.xlane.f32.xlu0 %v303
    %v305 = vpop.xlane.xlu0 %304
    %v306 = vsel %vm130, %v262, 0.0
    %307 = vadd.xlane.f32.xlu0 %v306
    %v308 = vpop.xlane.xlu0 %307
    %v309 = vsel %vm130, %v263, 0.0
    %310 = vadd.xlane.f32.xlu0 %v309
    %v311 = vpop.xlane.xlu0 %310
    %vm320 = vcmask 1041409
    %v321 = vsel %vm320, %v148, %v139
    %vm322 = vcmask 1042434
    %v323 = vsel %vm322, %v157, %v321
    %vm324 = vcmask 1043459
    %v325 = vsel %vm324, %v166, %v323
    %v326 = vsel %vm320, %v184, %v175
    %v327 = vsel %vm322, %v193, %v326
    %v328 = vsel %vm324, %v202, %v327
    %vm331 = vcmask 125952
    %v332 = vsel %vm331, %v325, 0.0
    %333 = vadd.xlane.f32.xlu0 %v332
    %v334 = vpop.xlane.xlu0 %333
    %v335 = vsel %vm331, %v328, 0.0
    %336 = vadd.xlane.f32.xlu0 %v335
    %v337 = vpop.xlane.xlu0 %336
    %vm338 = vcmask 1043456
    %v339 = vsel %vm338, %v334, 0.0
    %v340 = vsel %vm338, %v337, 0.0
    %v341 = vadd.f32 %v339, %v340
    %v342 = vrcp.pop 32.0
    %v343 = vmul.f32 %v341, %v342
    %v345 = vrot.slane %v343, 1
    %v346 = vrot.slane %v343, 2
    %v347 = vrot.slane %v343, 3
    %v352 = vsub.f32 %v139, %v343
    %v353 = vsub.f32 %v148, %v345
    %v354 = vsub.f32 %v157, %v346
    %v355 = vsub.f32 %v166, %v347
    %v356 = vsub.f32 %v175, %v343
    %v357 = vsub.f32 %v184, %v345
    %v358 = vsub.f32 %v193, %v346
    %v359 = vsub.f32 %v202, %v347
    %v360 = vmul.f32 %v352, %v352
    %v361 = vmul.f32 %v353, %v353
    %v362 = vmul.f32 %v354, %v354
    %v363 = vmul.f32 %v355, %v355
    %v364 = vmul.f32 %v356, %v356
    %v365 = vmul.f32 %v357, %v357
    %v366 = vmul.f32 %v358, %v358
    %v367 = vmul.f32 %v359, %v359
    %v376 = vrot.slane %v361, 7
    %v377 = vsel %vm320, %v376, %v360
    %v378 = vrot.slane %v362, 6
    %v379 = vsel %vm322, %v378, %v377
    %v380 = vrot.slane %v363, 5
    %v381 = vsel %vm324, %v380, %v379
    %v382 = vrot.slane %v365, 7
    %v383 = vsel %vm320, %v382, %v364
    %v384 = vrot.slane %v366, 6
    %v385 = vsel %vm322, %v384, %v383
    %v386 = vrot.slane %v367, 5
    %v387 = vsel %vm324, %v386, %v385
    %v390 = vsel %vm331, %v381, 0.0
    %391 = vadd.xlane.f32.xlu0 %v390
    %v392 = vpop.xlane.xlu0 %391
    %v393 = vsel %vm331, %v387, 0.0
    %394 = vadd.xlane.f32.xlu0 %v393
    %v395 = vpop.xlane.xlu0 %394
    %v396 = vsel %vm338, %v392, 0.0
    %v397 = vsel %vm338, %v395, 0.0
    %v398 = vadd.f32 %v396, %v397
    %v399 = vmul.f32 %v398, %v342
    %v400 = vadd.f32 %v399, 1e-05
    %v401 = vrsqrt.pop %v400
    %v403 = vrot.slane %v401, 1
    %v404 = vrot.slane %v401, 2
    %v405 = vrot.slane %v401, 3
    %v410 = vmul.f32 %v352, %v401
    %v411 = vmul.f32 %v353, %v403
    %v412 = vmul.f32 %v354, %v404
    %v413 = vmul.f32 %v355, %v405
    %v414 = vmul.f32 %v356, %v401
    %v415 = vmul.f32 %v357, %v403
    %v416 = vmul.f32 %v358, %v404
    %v417 = vmul.f32 %v359, %v405
    %v418 = vmax.f32 %v410, 0.0
    %v419 = vmax.f32 %v411, 0.0
    %v420 = vmax.f32 %v412, 0.0
    %v421 = vmax.f32 %v413, 0.0
    %v422 = vmax.f32 %v414, 0.0
    %v423 = vmax.f32 %v415, 0.0
    %v424 = vmax.f32 %v416, 0.0
    %v425 = vmax.f32 %v417, 0.0
    %v442 = vlaneseq
    %v443 = vand.u32 %v442, 127
    %v444 = vlaneseq
    %v445 = vshrl.u32 %v444, 7
    %v446 = vsub.s32 %v443, %v445
    %v447 = vrot.slane %v266, %v446
    %v448 = vadd.s32 %v443, 4294967288
    %v449 = vlaneseq
    %v450 = vshrl.u32 %v449, 7
    %v451 = vsub.s32 %v448, %v450
    %v452 = vrot.slane %v269, %v451
    %vm453 = vcmask 130112
    %v454 = vsel %vm453, %v452, %v447
    %v455 = vlaneseq
    %v456 = vshrl.u32 %v455, 7
    %v457 = vsub.s32 %v443, %v456
    %v458 = vrot.slane %v272, %v457
    %v459 = vlaneseq
    %v460 = vshrl.u32 %v459, 7
    %v461 = vsub.s32 %v448, %v460
    %v462 = vrot.slane %v275, %v461
    %v463 = vsel %vm453, %v462, %v458
    %v464 = vlaneseq
    %v465 = vshrl.u32 %v464, 7
    %v466 = vsub.s32 %v443, %v465
    %v467 = vrot.slane %v278, %v466
    %v468 = vlaneseq
    %v469 = vshrl.u32 %v468, 7
    %v470 = vsub.s32 %v448, %v469
    %v471 = vrot.slane %v281, %v470
    %v472 = vsel %vm453, %v471, %v467
    %v473 = vlaneseq
    %v474 = vshrl.u32 %v473, 7
    %v475 = vsub.s32 %v443, %v474
    %v476 = vrot.slane %v284, %v475
    %v477 = vlaneseq
    %v478 = vshrl.u32 %v477, 7
    %v479 = vsub.s32 %v448, %v478
    %v480 = vrot.slane %v287, %v479
    %v481 = vsel %vm453, %v480, %v476
    %v482 = vlaneseq
    %v483 = vshrl.u32 %v482, 7
    %v484 = vsub.s32 %v443, %v483
    %v485 = vrot.slane %v290, %v484
    %v486 = vlaneseq
    %v487 = vshrl.u32 %v486, 7
    %v488 = vsub.s32 %v448, %v487
    %v489 = vrot.slane %v293, %v488
    %v490 = vsel %vm453, %v489, %v485
    %v491 = vlaneseq
    %v492 = vshrl.u32 %v491, 7
    %v493 = vsub.s32 %v443, %v492
    %v494 = vrot.slane %v296, %v493
    %v495 = vlaneseq
    %v496 = vshrl.u32 %v495, 7
    %v497 = vsub.s32 %v448, %v496
    %v498 = vrot.slane %v299, %v497
    %v499 = vsel %vm453, %v498, %v494
    %v500 = vlaneseq
    %v501 = vshrl.u32 %v500, 7
    %v502 = vsub.s32 %v443, %v501
    %v503 = vrot.slane %v302, %v502
    %v504 = vlaneseq
    %v505 = vshrl.u32 %v504, 7
    %v506 = vsub.s32 %v448, %v505
    %v507 = vrot.slane %v305, %v506
    %v508 = vsel %vm453, %v507, %v503
    %v509 = vlaneseq
    %v510 = vshrl.u32 %v509, 7
    %v511 = vsub.s32 %v443, %v510
    %v512 = vrot.slane %v308, %v511
    %v513 = vlaneseq
    %v514 = vshrl.u32 %v513, 7
    %v515 = vsub.s32 %v448, %v514
    %v516 = vrot.slane %v311, %v515
    %v517 = vsel %vm453, %v516, %v512
    %v518 = vsel %vm320, %v463, %v454
    %v519 = vsel %vm322, %v472, %v518
    %v520 = vsel %vm324, %v481, %v519
    %v521 = vsel %vm320, %v499, %v490
    %v522 = vsel %vm322, %v508, %v521
    %v523 = vsel %vm324, %v517, %v522
    %v526 = vsel %vm331, %v520, 0.0
    %527 = vadd.xlane.f32.xlu0 %v526
    %v528 = vpop.xlane.xlu0 %527
    %v529 = vsel %vm331, %v523, 0.0
    %530 = vadd.xlane.f32.xlu0 %v529
    %v531 = vpop.xlane.xlu0 %530
    %v532 = vsel %vm338, %v528, 0.0
    %v533 = vsel %vm338, %v531, 0.0
    %v534 = vadd.f32 %v532, %v533
    %v535 = vmul.f32 %v534, %v342
    %v537 = vlaneseq
    %v538 = vshrl.u32 %v537, 7
    %v539 = vsub.s32 0, %v538
    %v540 = vrot.slane %v535, %v539
    %v541 = vlaneseq
    %v542 = vshrl.u32 %v541, 7
    %v543 = vsub.s32 1, %v542
    %v544 = vrot.slane %v535, %v543
    %v545 = vlaneseq
    %v546 = vshrl.u32 %v545, 7
    %v547 = vsub.s32 2, %v546
    %v548 = vrot.slane %v535, %v547
    %v549 = vlaneseq
    %v550 = vshrl.u32 %v549, 7
    %v551 = vsub.s32 3, %v550
    %v552 = vrot.slane %v535, %v551
    %v557 = vsub.f32 %v266, %v540
    %v558 = vsub.f32 %v269, %v540
    %v559 = vsub.f32 %v272, %v544
    %v560 = vsub.f32 %v275, %v544
    %v561 = vsub.f32 %v278, %v548
    %v562 = vsub.f32 %v281, %v548
    %v563 = vsub.f32 %v284, %v552
    %v564 = vsub.f32 %v287, %v552
    %v565 = vsub.f32 %v290, %v540
    %v566 = vsub.f32 %v293, %v540
    %v567 = vsub.f32 %v296, %v544
    %v568 = vsub.f32 %v299, %v544
    %v569 = vsub.f32 %v302, %v548
    %v570 = vsub.f32 %v305, %v548
    %v571 = vsub.f32 %v308, %v552
    %v572 = vsub.f32 %v311, %v552
    %v573 = vmul.f32 %v557, %v557
    %v574 = vmul.f32 %v558, %v558
    %v575 = vmul.f32 %v559, %v559
    %v576 = vmul.f32 %v560, %v560
    %v577 = vmul.f32 %v561, %v561
    %v578 = vmul.f32 %v562, %v562
    %v579 = vmul.f32 %v563, %v563
    %v580 = vmul.f32 %v564, %v564
    %v581 = vmul.f32 %v565, %v565
    %v582 = vmul.f32 %v566, %v566
    %v583 = vmul.f32 %v567, %v567
    %v584 = vmul.f32 %v568, %v568
    %v585 = vmul.f32 %v569, %v569
    %v586 = vmul.f32 %v570, %v570
    %v587 = vmul.f32 %v571, %v571
    %v588 = vmul.f32 %v572, %v572
    %605 = vset.pattern.permute.xlu0 0
    %606 = vperm.xlu0 %605, %v573
    %v607 = vpop.permute.xlu0 %606
    %608 = vset.pattern.permute.xlu0 0
    %609 = vperm.xlu0 %608, %v574
    %v610 = vpop.permute.xlu0 %609
    %611 = vset.pattern.permute.xlu0 0
    %612 = vperm.xlu0 %611, %v575
    %v613 = vpop.permute.xlu0 %612
    %614 = vset.pattern.permute.xlu0 0
    %615 = vperm.xlu0 %614, %v576
    %v616 = vpop.permute.xlu0 %615
    %617 = vset.pattern.permute.xlu0 0
    %618 = vperm.xlu0 %617, %v577
    %v619 = vpop.permute.xlu0 %618
    %620 = vset.pattern.permute.xlu0 0
    %621 = vperm.xlu0 %620, %v578
    %v622 = vpop.permute.xlu0 %621
    %623 = vset.pattern.permute.xlu0 0
    %624 = vperm.xlu0 %623, %v579
    %v625 = vpop.permute.xlu0 %624
    %626 = vset.pattern.permute.xlu0 0
    %627 = vperm.xlu0 %626, %v580
    %v628 = vpop.permute.xlu0 %627
    %629 = vset.pattern.permute.xlu0 0
    %630 = vperm.xlu0 %629, %v581
    %v631 = vpop.permute.xlu0 %630
    %632 = vset.pattern.permute.xlu0 0
    %633 = vperm.xlu0 %632, %v582
    %v634 = vpop.permute.xlu0 %633
    %635 = vset.pattern.permute.xlu0 0
    %636 = vperm.xlu0 %635, %v583
    %v637 = vpop.permute.xlu0 %636
    %638 = vset.pattern.permute.xlu0 0
    %639 = vperm.xlu0 %638, %v584
    %v640 = vpop.permute.xlu0 %639
    %641 = vset.pattern.permute.xlu0 0
    %642 = vperm.xlu0 %641, %v585
    %v643 = vpop.permute.xlu0 %642
    %644 = vset.pattern.permute.xlu0 0
    %645 = vperm.xlu0 %644, %v586
    %v646 = vpop.permute.xlu0 %645
    %647 = vset.pattern.permute.xlu0 0
    %648 = vperm.xlu0 %647, %v587
    %v649 = vpop.permute.xlu0 %648
    %650 = vset.pattern.permute.xlu0 0
    %651 = vperm.xlu0 %650, %v588
    %v652 = vpop.permute.xlu0 %651
    %v653 = vlaneseq
    %v654 = vshrl.u32 %v653, 7
    %v655 = vsub.s32 %v443, %v654
    %v656 = vrot.slane %v607, %v655
    %v657 = vlaneseq
    %v658 = vshrl.u32 %v657, 7
    %v659 = vsub.s32 %v448, %v658
    %v660 = vrot.slane %v610, %v659
    %v661 = vsel %vm453, %v660, %v656
    %v662 = vlaneseq
    %v663 = vshrl.u32 %v662, 7
    %v664 = vsub.s32 %v443, %v663
    %v665 = vrot.slane %v613, %v664
    %v666 = vlaneseq
    %v667 = vshrl.u32 %v666, 7
    %v668 = vsub.s32 %v448, %v667
    %v669 = vrot.slane %v616, %v668
    %v670 = vsel %vm453, %v669, %v665
    %v671 = vlaneseq
    %v672 = vshrl.u32 %v671, 7
    %v673 = vsub.s32 %v443, %v672
    %v674 = vrot.slane %v619, %v673
    %v675 = vlaneseq
    %v676 = vshrl.u32 %v675, 7
    %v677 = vsub.s32 %v448, %v676
    %v678 = vrot.slane %v622, %v677
    %v679 = vsel %vm453, %v678, %v674
    %v680 = vlaneseq
    %v681 = vshrl.u32 %v680, 7
    %v682 = vsub.s32 %v443, %v681
    %v683 = vrot.slane %v625, %v682
    %v684 = vlaneseq
    %v685 = vshrl.u32 %v684, 7
    %v686 = vsub.s32 %v448, %v685
    %v687 = vrot.slane %v628, %v686
    %v688 = vsel %vm453, %v687, %v683
    %v689 = vlaneseq
    %v690 = vshrl.u32 %v689, 7
    %v691 = vsub.s32 %v443, %v690
    %v692 = vrot.slane %v631, %v691
    %v693 = vlaneseq
    %v694 = vshrl.u32 %v693, 7
    %v695 = vsub.s32 %v448, %v694
    %v696 = vrot.slane %v634, %v695
    %v697 = vsel %vm453, %v696, %v692
    %v698 = vlaneseq
    %v699 = vshrl.u32 %v698, 7
    %v700 = vsub.s32 %v443, %v699
    %v701 = vrot.slane %v637, %v700
    %v702 = vlaneseq
    %v703 = vshrl.u32 %v702, 7
    %v704 = vsub.s32 %v448, %v703
    %v705 = vrot.slane %v640, %v704
    %v706 = vsel %vm453, %v705, %v701
    %v707 = vlaneseq
    %v708 = vshrl.u32 %v707, 7
    %v709 = vsub.s32 %v443, %v708
    %v710 = vrot.slane %v643, %v709
    %v711 = vlaneseq
    %v712 = vshrl.u32 %v711, 7
    %v713 = vsub.s32 %v448, %v712
    %v714 = vrot.slane %v646, %v713
    %v715 = vsel %vm453, %v714, %v710
    %v716 = vlaneseq
    %v717 = vshrl.u32 %v716, 7
    %v718 = vsub.s32 %v443, %v717
    %v719 = vrot.slane %v649, %v718
    %v720 = vlaneseq
    %v721 = vshrl.u32 %v720, 7
    %v722 = vsub.s32 %v448, %v721
    %v723 = vrot.slane %v652, %v722
    %v724 = vsel %vm453, %v723, %v719
    %v725 = vsel %vm320, %v670, %v661
    %v726 = vsel %vm322, %v679, %v725
    %v727 = vsel %vm324, %v688, %v726
    %v728 = vsel %vm320, %v706, %v697
    %v729 = vsel %vm322, %v715, %v728
    %v730 = vsel %vm324, %v724, %v729
    %v733 = vsel %vm331, %v727, 0.0
    %734 = vadd.xlane.f32.xlu0 %v733
    %v735 = vpop.xlane.xlu0 %734
    %v736 = vsel %vm331, %v730, 0.0
    %737 = vadd.xlane.f32.xlu0 %v736
    %v738 = vpop.xlane.xlu0 %737
    %v739 = vsel %vm338, %v735, 0.0
    %v740 = vsel %vm338, %v738, 0.0
    %v741 = vadd.f32 %v739, %v740
    %v742 = vmul.f32 %v741, %v342
    %v743 = vadd.f32 %v742, 1e-05
    %v744 = vrsqrt.pop %v743
    %v746 = vlaneseq
    %v747 = vshrl.u32 %v746, 7
    %v748 = vsub.s32 0, %v747
    %v749 = vrot.slane %v744, %v748
    %v750 = vlaneseq
    %v751 = vshrl.u32 %v750, 7
    %v752 = vsub.s32 1, %v751
    %v753 = vrot.slane %v744, %v752
    %v754 = vlaneseq
    %v755 = vshrl.u32 %v754, 7
    %v756 = vsub.s32 2, %v755
    %v757 = vrot.slane %v744, %v756
    %v758 = vlaneseq
    %v759 = vshrl.u32 %v758, 7
    %v760 = vsub.s32 3, %v759
    %v761 = vrot.slane %v744, %v760
    %v766 = vmul.f32 %v557, %v749
    %v767 = vmul.f32 %v558, %v749
    %v768 = vmul.f32 %v559, %v753
    %v769 = vmul.f32 %v560, %v753
    %v770 = vmul.f32 %v561, %v757
    %v771 = vmul.f32 %v562, %v757
    %v772 = vmul.f32 %v563, %v761
    %v773 = vmul.f32 %v564, %v761
    %v774 = vmul.f32 %v565, %v749
    %v775 = vmul.f32 %v566, %v749
    %v776 = vmul.f32 %v567, %v753
    %v777 = vmul.f32 %v568, %v753
    %v778 = vmul.f32 %v569, %v757
    %v779 = vmul.f32 %v570, %v757
    %v780 = vmul.f32 %v571, %v761
    %v781 = vmul.f32 %v572, %v761
    %v782 = vmax.f32 %v766, 0.0
    %v783 = vmax.f32 %v767, 0.0
    %v784 = vmax.f32 %v768, 0.0
    %v785 = vmax.f32 %v769, 0.0
    %v786 = vmax.f32 %v770, 0.0
    %v787 = vmax.f32 %v771, 0.0
    %v788 = vmax.f32 %v772, 0.0
    %v789 = vmax.f32 %v773, 0.0
    %v790 = vmax.f32 %v774, 0.0
    %v791 = vmax.f32 %v775, 0.0
    %v792 = vmax.f32 %v776, 0.0
    %v793 = vmax.f32 %v777, 0.0
    %v794 = vmax.f32 %v778, 0.0
    %v795 = vmax.f32 %v779, 0.0
    %v796 = vmax.f32 %v780, 0.0
    %v797 = vmax.f32 %v781, 0.0
    %814 = vset.pattern.permute.xlu0 0
    %815 = vperm.xlu0 %814, %v782
    %v816 = vpop.permute.xlu0 %815
    %817 = vset.pattern.permute.xlu0 0
    %818 = vperm.xlu0 %817, %v783
    %v819 = vpop.permute.xlu0 %818
    %820 = vset.pattern.permute.xlu0 0
    %821 = vperm.xlu0 %820, %v784
    %v822 = vpop.permute.xlu0 %821
    %823 = vset.pattern.permute.xlu0 0
    %824 = vperm.xlu0 %823, %v785
    %v825 = vpop.permute.xlu0 %824
    %826 = vset.pattern.permute.xlu0 0
    %827 = vperm.xlu0 %826, %v786
    %v828 = vpop.permute.xlu0 %827
    %829 = vset.pattern.permute.xlu0 0
    %830 = vperm.xlu0 %829, %v787
    %v831 = vpop.permute.xlu0 %830
    %832 = vset.pattern.permute.xlu0 0
    %833 = vperm.xlu0 %832, %v788
    %v834 = vpop.permute.xlu0 %833
    %835 = vset.pattern.permute.xlu0 0
    %836 = vperm.xlu0 %835, %v789
    %v837 = vpop.permute.xlu0 %836
    %838 = vset.pattern.permute.xlu0 0
    %839 = vperm.xlu0 %838, %v790
    %v840 = vpop.permute.xlu0 %839
    %841 = vset.pattern.permute.xlu0 0
    %842 = vperm.xlu0 %841, %v791
    %v843 = vpop.permute.xlu0 %842
    %844 = vset.pattern.permute.xlu0 0
    %845 = vperm.xlu0 %844, %v792
    %v846 = vpop.permute.xlu0 %845
    %847 = vset.pattern.permute.xlu0 0
    %848 = vperm.xlu0 %847, %v793
    %v849 = vpop.permute.xlu0 %848
    %850 = vset.pattern.permute.xlu0 0
    %851 = vperm.xlu0 %850, %v794
    %v852 = vpop.permute.xlu0 %851
    %853 = vset.pattern.permute.xlu0 0
    %854 = vperm.xlu0 %853, %v795
    %v855 = vpop.permute.xlu0 %854
    %856 = vset.pattern.permute.xlu0 0
    %857 = vperm.xlu0 %856, %v796
    %v858 = vpop.permute.xlu0 %857
    %859 = vset.pattern.permute.xlu0 0
    %860 = vperm.xlu0 %859, %v797
    %v861 = vpop.permute.xlu0 %860
    %v862 = vlaneseq
    %v863 = vshrl.u32 %v862, 7
    %v864 = vsub.s32 %v443, %v863
    %v865 = vrot.slane %v816, %v864
    %v866 = vlaneseq
    %v867 = vshrl.u32 %v866, 7
    %v868 = vsub.s32 %v448, %v867
    %v869 = vrot.slane %v819, %v868
    %v870 = vsel %vm453, %v869, %v865
    %v871 = vlaneseq
    %v872 = vshrl.u32 %v871, 7
    %v873 = vsub.s32 %v443, %v872
    %v874 = vrot.slane %v822, %v873
    %v875 = vlaneseq
    %v876 = vshrl.u32 %v875, 7
    %v877 = vsub.s32 %v448, %v876
    %v878 = vrot.slane %v825, %v877
    %v879 = vsel %vm453, %v878, %v874
    %v880 = vlaneseq
    %v881 = vshrl.u32 %v880, 7
    %v882 = vsub.s32 %v443, %v881
    %v883 = vrot.slane %v828, %v882
    %v884 = vlaneseq
    %v885 = vshrl.u32 %v884, 7
    %v886 = vsub.s32 %v448, %v885
    %v887 = vrot.slane %v831, %v886
    %v888 = vsel %vm453, %v887, %v883
    %v889 = vlaneseq
    %v890 = vshrl.u32 %v889, 7
    %v891 = vsub.s32 %v443, %v890
    %v892 = vrot.slane %v834, %v891
    %v893 = vlaneseq
    %v894 = vshrl.u32 %v893, 7
    %v895 = vsub.s32 %v448, %v894
    %v896 = vrot.slane %v837, %v895
    %v897 = vsel %vm453, %v896, %v892
    %v898 = vlaneseq
    %v899 = vshrl.u32 %v898, 7
    %v900 = vsub.s32 %v443, %v899
    %v901 = vrot.slane %v840, %v900
    %v902 = vlaneseq
    %v903 = vshrl.u32 %v902, 7
    %v904 = vsub.s32 %v448, %v903
    %v905 = vrot.slane %v843, %v904
    %v906 = vsel %vm453, %v905, %v901
    %v907 = vlaneseq
    %v908 = vshrl.u32 %v907, 7
    %v909 = vsub.s32 %v443, %v908
    %v910 = vrot.slane %v846, %v909
    %v911 = vlaneseq
    %v912 = vshrl.u32 %v911, 7
    %v913 = vsub.s32 %v448, %v912
    %v914 = vrot.slane %v849, %v913
    %v915 = vsel %vm453, %v914, %v910
    %v916 = vlaneseq
    %v917 = vshrl.u32 %v916, 7
    %v918 = vsub.s32 %v443, %v917
    %v919 = vrot.slane %v852, %v918
    %v920 = vlaneseq
    %v921 = vshrl.u32 %v920, 7
    %v922 = vsub.s32 %v448, %v921
    %v923 = vrot.slane %v855, %v922
    %v924 = vsel %vm453, %v923, %v919
    %v925 = vlaneseq
    %v926 = vshrl.u32 %v925, 7
    %v927 = vsub.s32 %v443, %v926
    %v928 = vrot.slane %v858, %v927
    %v929 = vlaneseq
    %v930 = vshrl.u32 %v929, 7
    %v931 = vsub.s32 %v448, %v930
    %v932 = vrot.slane %v861, %v931
    %v933 = vsel %vm453, %v932, %v928
    %v942 = vmul.f32 %v418, %v870
    %v943 = vmul.f32 %v419, %v879
    %v944 = vmul.f32 %v420, %v888
    %v945 = vmul.f32 %v421, %v897
    %v946 = vmul.f32 %v422, %v906
    %v947 = vmul.f32 %v423, %v915
    %v948 = vmul.f32 %v424, %v924
    %v949 = vmul.f32 %v425, %v933
    %v958 = vrot.slane %v943, 7
    %v959 = vsel %vm320, %v958, %v942
    %v960 = vrot.slane %v944, 6
    %v961 = vsel %vm322, %v960, %v959
    %v962 = vrot.slane %v945, 5
    %v963 = vsel %vm324, %v962, %v961
    %v964 = vrot.slane %v947, 7
    %v965 = vsel %vm320, %v964, %v946
    %v966 = vrot.slane %v948, 6
    %v967 = vsel %vm322, %v966, %v965
    %v968 = vrot.slane %v949, 5
    %v969 = vsel %vm324, %v968, %v967
    %v972 = vsel %vm331, %v963, 0.0
    %973 = vadd.xlane.f32.xlu0 %v972
    %v974 = vpop.xlane.xlu0 %973
    %v975 = vsel %vm331, %v969, 0.0
    %976 = vadd.xlane.f32.xlu0 %v975
    %v977 = vpop.xlane.xlu0 %976
    %v980 = vlaneseq
    %v981 = vshrl.u32 %v980, 7
    %v982 = vsub.s32 %v443, %v981
    %v983 = vrot.slane %v974, %v982
    %v984 = vlaneseq
    %v985 = vshrl.u32 %v984, 7
    %v986 = vsub.s32 %v443, %v985
    %v987 = vrot.slane %v977, %v986
    %v988 = vsel %vm320, %v987, %v983
    %vm990 = vcmask 25600
    %991 = vst.msk [vmem:[#allocation8] sm:$0x3] %vm990, %v988
    // Predicated region
    $region26: #{tpu_custom_call.1} parent=1 // pred_check
      _
    $region27: #{tpu_custom_call.1} parent=1 // pred_check_branch
      %993 = sbr.rel (0) target = $region29
    $region28: #{tpu_custom_call.1} parent=1 // pred_region
      %s995 = ssub.s32 32, 32
      %996 = vsyncadd [#allocation4], %s995
      %s998 = sshll.u32 [#allocation8], 4
      %s999 = int_to_ptr.vmem [resolvable:$true] %s998
      %1001 = dma.vmem_to_hbm [thread:$0]  %s999, 32, %s3, [#allocation4]
    $region29: #{tpu_custom_call.1} parent=1 // pred_fallthru
      _
    // Predicated region
    $region30: #{tpu_custom_call.1} parent=1 // pred_check
      _
    $region31: #{tpu_custom_call.1} parent=1 // pred_check_branch
      %1003 = sbr.rel (0) target = $region33
    $region32: #{tpu_custom_call.1} parent=1 // pred_region
      %1004 = dma.done [#allocation4], 32
    $region33: #{tpu_custom_call.1} parent=1 // pred_fallthru
      _
    %1005 = vsyncpa [#allocation3], 1
    %1006 = vsyncpa [#allocation6], 1
    %1007 = vsyncpa [#allocation4], 1

</llo_original>
